<compile_context>
chip_gen: v5e
topology: v5e:2x2
jax: 0.10.0
libtpu: 0.0.40
codegen_flags: <defaults>
</compile_context>

<pallas_src>
import jax
import jax.numpy as jnp
from jax.experimental import pallas as pl
from jax.experimental.pallas import tpu as pltpu

_EPS_F32 = 1e-4   # geoopt EPS[torch.float32]
_TINY = 1e-30     # guard for rsqrt of a (possibly zero / garbage-boundary) squared norm


# ---------------------------------------------------------------------------
# Kernels
# ---------------------------------------------------------------------------
def _sphere_expmap_tail(x, u, y, nsq_u, nsq_y, out_dtype):
    """Shared elementwise tail. nsq_* broadcast against x/u."""
    norm_u = jnp.sqrt(nsq_u)
    on_exp = norm_u > _EPS_F32                                   # single mask, reused
    inv_norm_u = jax.lax.rsqrt(jnp.maximum(nsq_u, _TINY))        # EUP, guarded
    exp_val = x * jnp.cos(norm_u) + u * (jnp.sin(norm_u) * inv_norm_u)
    inv_norm_y = jax.lax.rsqrt(jnp.maximum(nsq_y, _TINY))        # EUP, guarded (no NaN retr)
    retr_val = y * inv_norm_y
    return jnp.where(on_exp, exp_val, retr_val).astype(out_dtype)


def _expmap_kernel_rowwise(x_ref, u_ref, o_ref):
    """General path: reduction over the (full) last axis of the block."""
    x = x_ref[...].astype(jnp.float32)
    u = u_ref[...].astype(jnp.float32)
    nsq_u = jnp.sum(u * u, axis=-1, keepdims=True)
    y = x + u
    nsq_y = jnp.sum(y * y, axis=-1, keepdims=True)
    o_ref[...] = _sphere_expmap_tail(x, u, y, nsq_u, nsq_y, o_ref.dtype)


def _expmap_kernel_folded(x_ref, u_ref, seg_ref, o_ref):
    """Lane-dense path: G original rows folded into one 128-wide row.

    seg_ref is the (L, L) 0/1 block-diagonal segment matrix; (v*v) @ seg gives
    each lane the squared norm of its own original row (MXU does the segmented
    reduction + broadcast in one shot).
    """
    x = x_ref[...].astype(jnp.float32)
    u = u_ref[...].astype(jnp.float32)
    seg = seg_ref[...]
    nsq_u = jnp.dot(u * u, seg, preferred_element_type=jnp.float32,
                    precision=jax.lax.Precision.HIGHEST)
    y = x + u
    nsq_y = jnp.dot(y * y, seg, preferred_element_type=jnp.float32,
                    precision=jax.lax.Precision.HIGHEST)
    o_ref[...] = _sphere_expmap_tail(x, u, y, nsq_u, nsq_y, o_ref.dtype)


# ---------------------------------------------------------------------------
# Wrapper
# ---------------------------------------------------------------------------
def _sublane_multiple(dtype) -> int:
    # f32 -> 8 rows per vreg, bf16 -> 16, int8/fp8 -> 32
    return 8 * max(1, 4 // jnp.dtype(dtype).itemsize)


def _pick_row_tile(n_rows: int, lane: int, dtype,
                   target_block_bytes: int = 1 << 20, max_rows: int = 4096) -> int:
    """Largest row tile such that one block is ~<= target_block_bytes (keeps
    3 slabs x 2 pipeline buffers + temporaries well under the VMEM limit on
    every generation), rounded to the dtype sublane packing."""
    sub = _sublane_multiple(dtype)
    itemsize = jnp.dtype(dtype).itemsize
    tm = (target_block_bytes // max(1, lane * itemsize)) // sub * sub
    tm = int(max(sub, min(tm, max_rows)))
    if n_rows <= tm:
        return n_rows      # single block: full (possibly odd-sized) row dim is allowed
    return tm


def exponential_map(x: jax.Array, u: jax.Array) -> jax.Array:
    """Sphere expmap_x(u) (geoopt semantics) with the hot path in Pallas."""
    assert x.shape == u.shape, "x and u must have the same shape"
    u = u.astype(x.dtype)
    orig_shape = x.shape
    D = orig_shape[-1]
    N = 1
    for s in orig_shape[:-1]:
        N *= s
    dtype = x.dtype
    itemsize = jnp.dtype(dtype).itemsize
    sub = _sublane_multiple(dtype)

    # Lane-dense folding: pack G = 128 // D rows into one 128-wide row when it is
    # a pure (free) reshape and the folded row count keeps blocks sublane-aligned.
    G = 128 // D if (0 < D < 128 and 128 % D == 0) else 1
    fold = (G > 1) and N > 0 and (N % G == 0) and ((N // G) % sub == 0)
    if fold:
        L = 128
        rows = N // G
    else:
        L = D
        rows = N

    x2 = x.reshape(rows, L)
    u2 = u.reshape(rows, L)

    tm = _pick_row_tile(rows, L, dtype)
    grid = (pl.cdiv(rows, tm),)          # ragged final block instead of jnp.pad copies

    row_spec = pl.BlockSpec((tm, L), lambda i: (i, 0))
    cost = pl.CostEstimate(
        flops=int(16 * N * D),
        transcendentals=int(5 * rows * L),
        bytes_accessed=int(3 * N * D * itemsize),
    )
    cparams = pltpu.CompilerParams(
        dimension_semantics=("parallel",),        # lets v7x shard the row grid across its 2 TCs
        vmem_limit_bytes=32 * 1024 * 1024,        # > v5e's 16 MiB default, safe on v7x (64 MiB phys)
    )

    if fold:
        lane_ids = jnp.arange(L, dtype=jnp.int32) // D
        seg = (lane_ids[:, None] == lane_ids[None, :]).astype(jnp.float32)  # (L, L) 0/1
        out = pl.pallas_call(
            _expmap_kernel_folded,
            out_shape=jax.ShapeDtypeStruct((rows, L), dtype),
            grid_spec=pltpu.PrefetchScalarGridSpec(
                num_scalar_prefetch=0,
                grid=grid,
                in_specs=[row_spec, row_spec,
                          pl.BlockSpec((L, L), lambda i: (0, 0))],  # constant block, fetched once
                out_specs=row_spec,
            ),
            compiler_params=cparams,
            cost_estimate=cost,
        )(x2, u2, seg)
    else:
        out = pl.pallas_call(
            _expmap_kernel_rowwise,
            out_shape=jax.ShapeDtypeStruct((rows, L), dtype),
            grid_spec=pltpu.PrefetchScalarGridSpec(
                num_scalar_prefetch=0,
                grid=grid,
                in_specs=[row_spec, row_spec],
                out_specs=row_spec,
            ),
            compiler_params=cparams,
            cost_estimate=cost,
        )(x2, u2)

    return out.reshape(orig_shape)


# ---------------------------------------------------------------------------
# Reference + tests
# ---------------------------------------------------------------------------
def _reference_expmap(x, u):
    norm_u = jnp.linalg.norm(u, axis=-1, keepdims=True)
    safe = jnp.where(norm_u > _EPS_F32, norm_u, 1.0)
    exp = x * jnp.cos(norm_u) + u * jnp.sin(norm_u) / safe
    y = x + u
    retr = y / jnp.linalg.norm(y, axis=-1, keepdims=True)
    return jnp.where(norm_u > _EPS_F32, exp, retr)


def _make_inputs(key, shape, zero_first=False):
    kx, ku = jax.random.split(key)
    x_raw = jax.random.normal(kx, shape, dtype=jnp.float32)
    x = x_raw / jnp.linalg.norm(x_raw, axis=-1, keepdims=True)          # points on the sphere
    u_raw = 0.3 * jax.random.normal(ku, shape, dtype=jnp.float32)
    u = u_raw - jnp.sum(u_raw * x, axis=-1, keepdims=True) * x          # tangent at x
    if zero_first:                                                      # exercise retraction branch
        D = shape[-1]
        u = u.reshape(-1, D).at[0].set(0.0).reshape(shape)
    return x, u


if __name__ == "__main__":
    # TODO(synk): only the Hypersphere (geoopt Sphere) manifold expmap is implemented;
    # space_to_manifold dispatch to other manifolds is out of scope for this kernel.
    key = jax.random.PRNGKey(0)
    k1, k2, k3, k4 = jax.random.split(key, 4)

    # 1) module-scale case: batch=2, seq=8, hidden=32 (points on S^31)
    x, u = _make_inputs(k1, (2, 8, 32), zero_first=True)
    out = jax.block_until_ready(exponential_map(x, u))
    ref = _reference_expmap(x, u)
    assert out.shape == x.shape and out.dtype == x.dtype
    assert jnp.allclose(out, ref, atol=1e-4, rtol=1e-4), "mismatch vs reference (small)"
    assert jnp.allclose(jnp.linalg.norm(out, axis=-1), 1.0, atol=1e-4), "output left the sphere"

    # 2) lane-dense folded path (G = 4 rows packed per 128-lane row)
    x2, u2 = _make_inputs(k2, (8, 16, 32), zero_first=True)
    o2 = jax.block_until_ready(exponential_map(x2, u2))
    assert jnp.allclose(o2, _reference_expmap(x2, u2), atol=1e-4, rtol=1e-4), "mismatch (folded)"

    # 3) folded path with multi-step grid and a ragged final row block (no padding copies)
    x3, u3 = _make_inputs(k3, (4100, 8, 32))
    o3 = jax.block_until_ready(exponential_map(x3, u3))
    assert jnp.allclose(o3, _reference_expmap(x3, u3), atol=1e-4, rtol=1e-4), "mismatch (ragged folded)"

    # 4) row-wise fallback path (D does not divide 128) with a ragged grid
    x4, u4 = _make_inputs(k4, (9000, 48))
    o4 = jax.block_until_ready(exponential_map(x4, u4))
    assert jnp.allclose(o4, _reference_expmap(x4, u4), atol=1e-4, rtol=1e-4), "mismatch (fallback)"

    print("KERNEL_OK")
</pallas_src>

<mosaic_0001>
module attributes {stable_mosaic.version = 11 : i64} {
  func.func @_expmap_kernel_rowwise(%arg0: i32, %arg1: memref<16x32xf32, #tpu.memory_space<vmem>>, %arg2: memref<16x32xf32, #tpu.memory_space<vmem>>, %arg3: memref<16x32xf32, #tpu.memory_space<vmem>>) attributes {dimension_semantics = [#tpu.dimension_semantics<parallel>], iteration_bounds = array<i64: 1>, scalar_prefetch = 0 : i64, scratch_operands = 0 : i64, tpu.core_type = #tpu.core_type<tc>, window_params = [{transform_indices = @transform_0, window_bounds = array<i64: 16, 32>}, {transform_indices = @transform_1, window_bounds = array<i64: 16, 32>}, {transform_indices = @transform_2, window_bounds = array<i64: 16, 32>}]} {
    %c0 = arith.constant 0 : index
    %c0_0 = arith.constant 0 : index
    %0 = vector.load %arg1[%c0, %c0_0] : memref<16x32xf32, #tpu.memory_space<vmem>>, vector<16x32xf32>
    %c0_1 = arith.constant 0 : index
    %c0_2 = arith.constant 0 : index
    %1 = vector.load %arg2[%c0_1, %c0_2] : memref<16x32xf32, #tpu.memory_space<vmem>>, vector<16x32xf32>
    %2 = arith.mulf %1, %1 : vector<16x32xf32>
    %cst = arith.constant dense<0.000000e+00> : vector<16xf32>
    %3 = vector.multi_reduction <add>, %2, %cst [1] : vector<16x32xf32> to vector<16xf32>
    %4 = vector.shape_cast %3 : vector<16xf32> to vector<16x1xf32>
    %5 = arith.addf %0, %1 : vector<16x32xf32>
    %6 = arith.mulf %5, %5 : vector<16x32xf32>
    %cst_3 = arith.constant dense<0.000000e+00> : vector<16xf32>
    %7 = vector.multi_reduction <add>, %6, %cst_3 [1] : vector<16x32xf32> to vector<16xf32>
    %8 = vector.shape_cast %7 : vector<16xf32> to vector<16x1xf32>
    %9 = math.sqrt %4 : vector<16x1xf32>
    %cst_4 = arith.constant 9.99999974E-5 : f32
    %10 = vector.broadcast %cst_4 : f32 to vector<16x1xf32>
    %11 = arith.cmpf ogt, %9, %10 : vector<16x1xf32>
    %cst_5 = arith.constant 1.000000e-30 : f32
    %12 = vector.broadcast %cst_5 : f32 to vector<16x1xf32>
    %13 = arith.maximumf %4, %12 : vector<16x1xf32>
    %14 = math.rsqrt %13 : vector<16x1xf32>
    %15 = math.cos %9 : vector<16x1xf32>
    %16 = vector.broadcast %15 : vector<16x1xf32> to vector<16x32xf32>
    %17 = arith.mulf %0, %16 : vector<16x32xf32>
    %18 = math.sin %9 : vector<16x1xf32>
    %19 = arith.mulf %18, %14 : vector<16x1xf32>
    %20 = vector.broadcast %19 : vector<16x1xf32> to vector<16x32xf32>
    %21 = arith.mulf %1, %20 : vector<16x32xf32>
    %22 = arith.addf %17, %21 : vector<16x32xf32>
    %cst_6 = arith.constant 1.000000e-30 : f32
    %23 = vector.broadcast %cst_6 : f32 to vector<16x1xf32>
    %24 = arith.maximumf %8, %23 : vector<16x1xf32>
    %25 = math.rsqrt %24 : vector<16x1xf32>
    %26 = vector.broadcast %25 : vector<16x1xf32> to vector<16x32xf32>
    %27 = arith.mulf %5, %26 : vector<16x32xf32>
    %28 = vector.shape_cast %11 : vector<16x1xi1> to vector<16x1xi1>
    %29 = vector.broadcast %28 : vector<16x1xi1> to vector<16x32xi1>
    %30 = arith.select %29, %22, %27 : vector<16x32xi1>, vector<16x32xf32>
    %c0_7 = arith.constant 0 : index
    %c0_8 = arith.constant 0 : index
    %31 = vector.load %arg3[%c0_7, %c0_8] : memref<16x32xf32, #tpu.memory_space<vmem>>, vector<16x32xf32>
    tpu.vector_store %arg3[%c0_7, %c0_8], %30 {strides = array<i32>} : memref<16x32xf32, #tpu.memory_space<vmem>>, vector<16x32xf32>,
    return
  }
  func.func @transform_0(%arg0: i32) -> (i32, i32) {
    %c0_i32 = arith.constant 0 : i32
    %c0_i32_0 = arith.constant 0 : i32
    return %arg0, %c0_i32 : i32, i32
  }
  func.func @transform_1(%arg0: i32) -> (i32, i32) {
    %c0_i32 = arith.constant 0 : i32
    %c0_i32_0 = arith.constant 0 : i32
    return %arg0, %c0_i32 : i32, i32
  }
  func.func @transform_2(%arg0: i32) -> (i32, i32) {
    %c0_i32 = arith.constant 0 : i32
    %c0_i32_0 = arith.constant 0 : i32
    return %arg0, %c0_i32 : i32, i32
  }
}

</mosaic_0001>

<llo_original>
// kernel: tpu_custom_call.1
$region0: #{tpu_custom_call.1}
  #allocation0 [shape = 'u32[]', space=smem, size = 0x4, offset = 0x4, fixed_abs, tag = 'smem constant byte address 0x4 - core index']
  #allocation1 [shape = 'u32[72,128]{1,0:T(1,128)}', space=vmem, size = 0x9000, scoped, tag = 'internal scratch']
  %s0 = inlined_call_operand.hbm [shape: f32[16,32], index: 0, kind: input, shape index: {}]
  %s1 = inlined_call_operand.hbm [shape: f32[16,32], index: 1, kind: input, shape index: {}]
  %s2 = inlined_call_operand.hbm [shape: f32[16,32], index: 2, kind: output, shape index: {}]
  %s3 = sld [smem:[#allocation0]]
  $region26: #{tpu_custom_call.1} parent=0
    _
  %s5 = ssub.s32 1, %s3
  %s6 = scalar_select 0, %s5, %s3
  $region1: #{tpu_custom_call.1} parent=0
    #allocation2 [shape = 'u8[8192]{0}', space=vmem, size = 0x2000, scoped, tag = 'input window, operand 0, single buffered']
    #allocation3 [shape = 's32[1]{0}', space=sflag, size = 0x4, scoped, tag = 'scoped memory for tpu_custom_call.1']
    #allocation4 [shape = 's32[1]{0}', space=sflag, size = 0x4, scoped, tag = 'scoped memory for tpu_custom_call.1']
    #allocation5 [shape = 'u8[8192]{0}', space=vmem, size = 0x2000, scoped, tag = 'input window, operand 1, single buffered']
    #allocation6 [shape = 's32[1]{0}', space=sflag, size = 0x4, scoped, tag = 'scoped memory for tpu_custom_call.1']
    #allocation7 [shape = 'u8[8192]{0}', space=vmem, size = 0x2000, scoped, tag = 'output window, operand 0, single buffered']
    %7 = vsyncpa [#allocation3], 0
    %8 = vsyncpa [#allocation6], 0
    %9 = vsyncpa [#allocation4], 0
    // Predicated region
    $region2: #{tpu_custom_call.1} parent=1 // pred_check
      _
    $region3: #{tpu_custom_call.1} parent=1 // pred_check_branch
      %11 = sbr.rel (0) target = $region5
    $region4: #{tpu_custom_call.1} parent=1 // pred_region
      %13 = vsyncadd [#allocation3], 0
      %s14 = sshll.u32 %s0, 4
      %s15 = int_to_ptr.hbm [resolvable:$true] %s14
      %s16 = sshll.u32 [#allocation2], 4
      %s17 = int_to_ptr.vmem [resolvable:$true] %s16
      %22 = dma.hbm_to_vmem [thread:$0]  %s15, 256, %s17, [#allocation3], 128, 128, 8
    $region5: #{tpu_custom_call.1} parent=1 // pred_fallthru
      _
    // Predicated region
    $region6: #{tpu_custom_call.1} parent=1 // pred_check
      _
    $region7: #{tpu_custom_call.1} parent=1 // pred_check_branch
      %24 = sbr.rel (0) target = $region9
    $region8: #{tpu_custom_call.1} parent=1 // pred_region
      %26 = vsyncadd [#allocation6], 0
      %s27 = sshll.u32 %s1, 4
      %s28 = int_to_ptr.hbm [resolvable:$true] %s27
      %s29 = sshll.u32 [#allocation5], 4
      %s30 = int_to_ptr.vmem [resolvable:$true] %s29
      %35 = dma.hbm_to_vmem [thread:$0]  %s28, 256, %s30, [#allocation6], 128, 128, 8
    $region9: #{tpu_custom_call.1} parent=1 // pred_fallthru
      _
    // Predicated region
    $region10: #{tpu_custom_call.1} parent=1 // pred_check
      _
    $region11: #{tpu_custom_call.1} parent=1 // pred_check_branch
      %37 = sbr.rel (0) target = $region13
    $region12: #{tpu_custom_call.1} parent=1 // pred_region
      %39 = dma.done [#allocation3], 256
    $region13: #{tpu_custom_call.1} parent=1 // pred_fallthru
      _
    // Predicated region
    $region14: #{tpu_custom_call.1} parent=1 // pred_check
      _
    $region15: #{tpu_custom_call.1} parent=1 // pred_check_branch
      %41 = sbr.rel (0) target = $region17
    $region16: #{tpu_custom_call.1} parent=1 // pred_region
      %43 = dma.done [#allocation6], 256
    $region17: #{tpu_custom_call.1} parent=1 // pred_fallthru
      _
    %v44 = vld [vmem:[#allocation2] sm:$0xff]
    %v45 = vld [vmem:[#allocation2 + $0x8] sm:$0xff]
    %v46 = vld [vmem:[#allocation5] sm:$0xff]
    %v47 = vld [vmem:[#allocation5 + $0x8] sm:$0xff]
    %v48 = vmul.f32 %v46, %v46
    %v49 = vmul.f32 %v47, %v47
    %vm50 = vcmask 261120
    %v51 = vsel %vm50, %v48, 0.0
    %52 = vadd.xlane.f32.xlu0 %v51
    %v53 = vpop.xlane.xlu0 %52
    %v54 = vsel %vm50, %v49, 0.0
    %55 = vadd.xlane.f32.xlu0 %v54
    %v56 = vpop.xlane.xlu0 %55
    %v57 = vadd.f32 %v44, %v46
    %v58 = vadd.f32 %v45, %v47
    %v59 = vmul.f32 %v57, %v57
    %v60 = vmul.f32 %v58, %v58
    %v61 = vsel %vm50, %v59, 0.0
    %62 = vadd.xlane.f32.xlu0 %v61
    %v63 = vpop.xlane.xlu0 %62
    %v64 = vsel %vm50, %v60, 0.0
    %65 = vadd.xlane.f32.xlu0 %v64
    %v66 = vpop.xlane.xlu0 %65
    %v67 = vrsqrt.pop %v53
    %v68 = vmul.f32 %v67, %v53
    %v69 = vmul.f32 %v68, %v67
    %v70 = vmul.f32 0.5, %v69
    %v71 = vsub.f32 1.5, %v70
    %v72 = vmul.f32 %v67, %v71
    %v73 = vmul.f32 %v53, %v72
    %vm74 = vcmp.eq.f32.partialorder %v53, inf
    %v75 = vsel %vm74, %v53, %v73
    %vm76 = vcmp.eq.f32.partialorder %v53, 0.0
    %v77 = vand.u32 %v53, 2147483648
    %v78 = vsel %vm76, %v77, %v75
    %v79 = vrsqrt.pop %v56
    %v80 = vmul.f32 %v79, %v56
    %v81 = vmul.f32 %v80, %v79
    %v82 = vmul.f32 0.5, %v81
    %v83 = vsub.f32 1.5, %v82
    %v84 = vmul.f32 %v79, %v83
    %v85 = vmul.f32 %v56, %v84
    %vm86 = vcmp.eq.f32.partialorder %v56, inf
    %v87 = vsel %vm86, %v56, %v85
    %vm88 = vcmp.eq.f32.partialorder %v56, 0.0
    %v89 = vand.u32 %v56, 2147483648
    %v90 = vsel %vm88, %v89, %v87
    %vm91 = vcmp.gt.f32.partialorder %v78, 0.0001
    %vm92 = vcmp.gt.f32.partialorder %v90, 0.0001
    %v93 = vmax.f32 %v53, 1e-30
    %v94 = vmax.f32 %v56, 1e-30
    %v95 = vrsqrt.pop %v93
    %v96 = vmul.f32 %v95, %v93
    %v97 = vmul.f32 %v96, %v95
    %v98 = vmul.f32 0.5, %v97
    %v99 = vsub.f32 1.5, %v98
    %v100 = vmul.f32 %v95, %v99
    %vm101 = vweird.f32 %v93
    %vm102 = vweird.f32 %v95
    %vm103 = vmor %vm101, %vm102
    %v104 = vsel %vm103, %v95, %v100
    %v105 = vrsqrt.pop %v94
    %v106 = vmul.f32 %v105, %v94
    %v107 = vmul.f32 %v106, %v105
    %v108 = vmul.f32 0.5, %v107
    %v109 = vsub.f32 1.5, %v108
    %v110 = vmul.f32 %v105, %v109
    %vm111 = vweird.f32 %v94
    %vm112 = vweird.f32 %v105
    %vm113 = vmor %vm111, %vm112
    %v114 = vsel %vm113, %v105, %v110
    %v115 = vand.u32 2147483647, %v78
    %vm116 = vcmp.le.f32.partialorder %v115, 0.7853982
    %vm117 = vcmp.lt.s32.totalorder %v78, 0
    %v118 = vand.u32 %v78, 2139095040
    %v119 = vshrl.u32 %v118, 23
    %v120 = vsub.s32 %v119, 127
    %v121 = vand.u32 2147483647, %v78
    %v122 = vand.u32 %v121, 8388607
    %v123 = vor.u32 %v122, 8388608
    %v124 = vsub.s32 0, %v123
    %v125 = vadd.s32 %v120, 1
    %vm126 = vcmp.gt.s32.totalorder %v125, 0
    %v127 = vsel %vm126, %v125, 0
    %v128 = vshrl.u32 %v127, 5
    %v129 = vand.u32 %v127, 31
    %v130 = vsub.s32 32, %v129
    %v131 = vshrl.u32 683565275, %v130
    %v132 = vshll.u32 683565275, %v129
    %v133 = vshrl.u32 2475754826, %v130
    %v134 = vor.u32 %v132, %v133
    %v135 = vshll.u32 2475754826, %v129
    %v136 = vshrl.u32 2131351028, %v130
    %v137 = vor.u32 %v135, %v136
    %v138 = vshll.u32 2131351028, %v129
    %v139 = vshrl.u32 2102212464, %v130
    %v140 = vor.u32 %v138, %v139
    %v141 = vshll.u32 2102212464, %v129
    %v142 = vshrl.u32 920167782, %v130
    %v143 = vor.u32 %v141, %v142
    %v144 = vshll.u32 920167782, %v129
    %v145 = vshrl.u32 1326507024, %v130
    %v146 = vor.u32 %v144, %v145
    %vm147 = vcmp.lt.s32.totalorder %v128, 1
    %vm148 = vcmp.lt.s32.totalorder %v128, 2
    %vm149 = vcmp.lt.s32.totalorder %v128, 3
    %vm150 = vcmp.lt.s32.totalorder %v128, 4
    %v151 = vsel %vm147, %v131, %v134
    %v152 = vsel %vm150, %v140, 2102212464
    %v153 = vsel %vm149, %v137, %v152
    %v154 = vsel %vm148, %v151, %v153
    %v155 = vsel %vm147, %v134, %v137
    %v156 = vsel %vm150, %v143, 920167782
    %v157 = vsel %vm149, %v140, %v156
    %v158 = vsel %vm148, %v155, %v157
    %v159 = vsel %vm147, %v137, %v140
    %v160 = vsel %vm150, %v146, 1326507024
    %v161 = vsel %vm149, %v143, %v160
    %v162 = vsel %vm148, %v159, %v161
    %v163 = vshll.u32 %v123, 8
    %v164 = vand.u32 %v163, 65535
    %v165 = vshrl.u32 %v163, 16
    %v166 = vand.u32 %v162, 65535
    %v167 = vshrl.u32 %v162, 16
    %v168 = vmul.u32 %v164, %v166
    %v169 = vmul.u32 %v164, %v167
    %v170 = vmul.u32 %v165, %v166
    %v171 = vmul.u32 %v165, %v167
    %v172 = vshll.u32 %v169, 16
    %v173 = vshrl.u32 %v169, 16
    %v174 = vshll.u32 %v170, 16
    %v175 = vshrl.u32 %v170, 16
    %vm176 = vc.u32 %v168, %v172
    %v177 = vsel %vm176, 1, 0
    %v178 = vadd.s32 %v168, %v172
    %v179 = vadd.s32 %v171, %v177
    %vm180 = vc.u32 %v178, %v174
    %v181 = vsel %vm180, 1, 0
    %v182 = vadd.s32 %v178, %v174
    %v183 = vadd.s32 %v179, %v181
    %v184 = vadd.s32 %v183, %v173
    %v185 = vadd.s32 %v184, %v175
    %v186 = vand.u32 %v163, 65535
    %v187 = vshrl.u32 %v163, 16
    %v188 = vand.u32 %v158, 65535
    %v189 = vshrl.u32 %v158, 16
    %v190 = vmul.u32 %v186, %v188
    %v191 = vmul.u32 %v186, %v189
    %v192 = vmul.u32 %v187, %v188
    %v193 = vmul.u32 %v187, %v189
    %v194 = vshll.u32 %v191, 16
    %v195 = vshrl.u32 %v191, 16
    %v196 = vshll.u32 %v192, 16
    %v197 = vshrl.u32 %v192, 16
    %vm198 = vc.u32 %v190, %v194
    %v199 = vsel %vm198, 1, 0
    %v200 = vadd.s32 %v190, %v194
    %v201 = vadd.s32 %v193, %v199
    %vm202 = vc.u32 %v200, %v196
    %v203 = vsel %vm202, 1, 0
    %v204 = vadd.s32 %v200, %v196
    %v205 = vadd.s32 %v201, %v203
    %v206 = vadd.s32 %v205, %v195
    %v207 = vadd.s32 %v206, %v197
    %v208 = vmul.u32 %v163, %v154
    %v209 = vadd.s32 %v185, %v204
    %vm210 = vc.u32 %v185, %v204
    %v211 = vadd.s32 %v207, 1
    %v212 = vsel %vm210, %v211, %v207
    %v213 = vadd.s32 %v208, %v212
    %v214 = vadd.s32 %v213, 536870912
    %v215 = vshrl.u32 %v214, 30
    %v216 = vshll.u32 %v215, 30
    %v217 = vsub.s32 %v213, %v216
    %vm218 = vcmp.lt.s32.totalorder %v217, 0
    %v219 = vsub.s32 0, %v217
    %v220 = vsel %vm218, %v219, %v217
    %v221 = vclz %v220
    %v222 = vsub.s32 %v221, 2
    %vm223 = vcmp.gt.s32.totalorder 0, %v222
    %v224 = vsel %vm223, 0, %v222
    %v225 = vsub.s32 32, %v224
    %v226 = vshll.u32 %v217, %v224
    %v227 = vshrl.u32 %v209, %v225
    %v228 = vor.u32 %v226, %v227
    %v229 = vsub.s32 4294967266, %v224
    %v230 = vadd.s32 %v229, 127
    %v231 = vshll.u32 %v230, 23
    %v232 = vor.u32 4788187, %v231
    %v233 = vand.u32 2147483647, %v232
    %v235 = vcvt.s32.f32 %v228
    %v236 = vmul.f32 %v235, %v233
    %v237 = vxor.u32 %v236, 2147483648
    %v238 = vsel %vm117, %v237, %v236
    %v239 = vsub.s32 4, %v215
    %v240 = vsel %vm117, %v239, %v215
    %v241 = vsel %vm116, %v78, %v238
    %v242 = vsel %vm116, 0, %v240
    %v243 = vmul.f32 %v241, %v241
    %v244 = vmul.f32 %v243, -0.001358992
    %v245 = vadd.f32 %v244, 0.041655596
    %v246 = vmul.f32 %v243, %v245
    %v247 = vadd.f32 %v246, -0.4999988
    %v248 = vmul.f32 %v243, %v247
    %v249 = vadd.f32 1.0, %v248
    %v250 = vmul.f32 %v241, %v241
    %v251 = vmul.f32 %v250, -0.00019511016
    %v252 = vadd.f32 %v251, 0.008332121
    %v253 = vmul.f32 %v250, %v252
    %v254 = vadd.f32 %v253, -0.16666654
    %v255 = vmul.f32 %v250, %v254
    %v256 = vadd.f32 %v255, 1.0
    %v257 = vmul.f32 %v256, %v241
    %vm258 = vweird.f32 %v78
    %v259 = vand.u32 %v242, 3
    %vm260 = vcmp.lt.s32.totalorder %v259, 2
    %vm261 = vcmp.eq.s32.totalorder %v259, 0
    %v262 = vxor.u32 %v257, 2147483648
    %v263 = vsel %vm261, %v249, %v262
    %vm264 = vcmp.eq.s32.totalorder %v259, 2
    %v265 = vxor.u32 %v249, 2147483648
    %v266 = vsel %vm264, %v265, %v257
    %v267 = vsel %vm260, %v263, %v266
    %v268 = vsel %vm258, nan, %v267
    %v269 = vand.u32 2147483647, %v90
    %vm270 = vcmp.le.f32.partialorder %v269, 0.7853982
    %vm271 = vcmp.lt.s32.totalorder %v90, 0
    %v272 = vand.u32 %v90, 2139095040
    %v273 = vshrl.u32 %v272, 23
    %v274 = vsub.s32 %v273, 127
    %v275 = vand.u32 2147483647, %v90
    %v276 = vand.u32 %v275, 8388607
    %v277 = vor.u32 %v276, 8388608
    %v278 = vsub.s32 0, %v277
    %v279 = vadd.s32 %v274, 1
    %vm280 = vcmp.gt.s32.totalorder %v279, 0
    %v281 = vsel %vm280, %v279, 0
    %v282 = vshrl.u32 %v281, 5
    %v283 = vand.u32 %v281, 31
    %v284 = vsub.s32 32, %v283
    %v285 = vshrl.u32 683565275, %v284
    %v286 = vshll.u32 683565275, %v283
    %v287 = vshrl.u32 2475754826, %v284
    %v288 = vor.u32 %v286, %v287
    %v289 = vshll.u32 2475754826, %v283
    %v290 = vshrl.u32 2131351028, %v284
    %v291 = vor.u32 %v289, %v290
    %v292 = vshll.u32 2131351028, %v283
    %v293 = vshrl.u32 2102212464, %v284
    %v294 = vor.u32 %v292, %v293
    %v295 = vshll.u32 2102212464, %v283
    %v296 = vshrl.u32 920167782, %v284
    %v297 = vor.u32 %v295, %v296
    %v298 = vshll.u32 920167782, %v283
    %v299 = vshrl.u32 1326507024, %v284
    %v300 = vor.u32 %v298, %v299
    %vm301 = vcmp.lt.s32.totalorder %v282, 1
    %vm302 = vcmp.lt.s32.totalorder %v282, 2
    %vm303 = vcmp.lt.s32.totalorder %v282, 3
    %vm304 = vcmp.lt.s32.totalorder %v282, 4
    %v305 = vsel %vm301, %v285, %v288
    %v306 = vsel %vm304, %v294, 2102212464
    %v307 = vsel %vm303, %v291, %v306
    %v308 = vsel %vm302, %v305, %v307
    %v309 = vsel %vm301, %v288, %v291
    %v310 = vsel %vm304, %v297, 920167782
    %v311 = vsel %vm303, %v294, %v310
    %v312 = vsel %vm302, %v309, %v311
    %v313 = vsel %vm301, %v291, %v294
    %v314 = vsel %vm304, %v300, 1326507024
    %v315 = vsel %vm303, %v297, %v314
    %v316 = vsel %vm302, %v313, %v315
    %v317 = vshll.u32 %v277, 8
    %v318 = vand.u32 %v317, 65535
    %v319 = vshrl.u32 %v317, 16
    %v320 = vand.u32 %v316, 65535
    %v321 = vshrl.u32 %v316, 16
    %v322 = vmul.u32 %v318, %v320
    %v323 = vmul.u32 %v318, %v321
    %v324 = vmul.u32 %v319, %v320
    %v325 = vmul.u32 %v319, %v321
    %v326 = vshll.u32 %v323, 16
    %v327 = vshrl.u32 %v323, 16
    %v328 = vshll.u32 %v324, 16
    %v329 = vshrl.u32 %v324, 16
    %vm330 = vc.u32 %v322, %v326
    %v331 = vsel %vm330, 1, 0
    %v332 = vadd.s32 %v322, %v326
    %v333 = vadd.s32 %v325, %v331
    %vm334 = vc.u32 %v332, %v328
    %v335 = vsel %vm334, 1, 0
    %v336 = vadd.s32 %v332, %v328
    %v337 = vadd.s32 %v333, %v335
    %v338 = vadd.s32 %v337, %v327
    %v339 = vadd.s32 %v338, %v329
    %v340 = vand.u32 %v317, 65535
    %v341 = vshrl.u32 %v317, 16
    %v342 = vand.u32 %v312, 65535
    %v343 = vshrl.u32 %v312, 16
    %v344 = vmul.u32 %v340, %v342
    %v345 = vmul.u32 %v340, %v343
    %v346 = vmul.u32 %v341, %v342
    %v347 = vmul.u32 %v341, %v343
    %v348 = vshll.u32 %v345, 16
    %v349 = vshrl.u32 %v345, 16
    %v350 = vshll.u32 %v346, 16
    %v351 = vshrl.u32 %v346, 16
    %vm352 = vc.u32 %v344, %v348
    %v353 = vsel %vm352, 1, 0
    %v354 = vadd.s32 %v344, %v348
    %v355 = vadd.s32 %v347, %v353
    %vm356 = vc.u32 %v354, %v350
    %v357 = vsel %vm356, 1, 0
    %v358 = vadd.s32 %v354, %v350
    %v359 = vadd.s32 %v355, %v357
    %v360 = vadd.s32 %v359, %v349
    %v361 = vadd.s32 %v360, %v351
    %v362 = vmul.u32 %v317, %v308
    %v363 = vadd.s32 %v339, %v358
    %vm364 = vc.u32 %v339, %v358
    %v365 = vadd.s32 %v361, 1
    %v366 = vsel %vm364, %v365, %v361
    %v367 = vadd.s32 %v362, %v366
    %v368 = vadd.s32 %v367, 536870912
    %v369 = vshrl.u32 %v368, 30
    %v370 = vshll.u32 %v369, 30
    %v371 = vsub.s32 %v367, %v370
    %vm372 = vcmp.lt.s32.totalorder %v371, 0
    %v373 = vsub.s32 0, %v371
    %v374 = vsel %vm372, %v373, %v371
    %v375 = vclz %v374
    %v376 = vsub.s32 %v375, 2
    %vm377 = vcmp.gt.s32.totalorder 0, %v376
    %v378 = vsel %vm377, 0, %v376
    %v379 = vsub.s32 32, %v378
    %v380 = vshll.u32 %v371, %v378
    %v381 = vshrl.u32 %v363, %v379
    %v382 = vor.u32 %v380, %v381
    %v383 = vsub.s32 4294967266, %v378
    %v384 = vadd.s32 %v383, 127
    %v385 = vshll.u32 %v384, 23
    %v386 = vor.u32 4788187, %v385
    %v387 = vand.u32 2147483647, %v386
    %v389 = vcvt.s32.f32 %v382
    %v390 = vmul.f32 %v389, %v387
    %v391 = vxor.u32 %v390, 2147483648
    %v392 = vsel %vm271, %v391, %v390
    %v393 = vsub.s32 4, %v369
    %v394 = vsel %vm271, %v393, %v369
    %v395 = vsel %vm270, %v90, %v392
    %v396 = vsel %vm270, 0, %v394
    %v397 = vmul.f32 %v395, %v395
    %v398 = vmul.f32 %v397, -0.001358992
    %v399 = vadd.f32 %v398, 0.041655596
    %v400 = vmul.f32 %v397, %v399
    %v401 = vadd.f32 %v400, -0.4999988
    %v402 = vmul.f32 %v397, %v401
    %v403 = vadd.f32 1.0, %v402
    %v404 = vmul.f32 %v395, %v395
    %v405 = vmul.f32 %v404, -0.00019511016
    %v406 = vadd.f32 %v405, 0.008332121
    %v407 = vmul.f32 %v404, %v406
    %v408 = vadd.f32 %v407, -0.16666654
    %v409 = vmul.f32 %v404, %v408
    %v410 = vadd.f32 %v409, 1.0
    %v411 = vmul.f32 %v410, %v395
    %vm412 = vweird.f32 %v90
    %v413 = vand.u32 %v396, 3
    %vm414 = vcmp.lt.s32.totalorder %v413, 2
    %vm415 = vcmp.eq.s32.totalorder %v413, 0
    %v416 = vxor.u32 %v411, 2147483648
    %v417 = vsel %vm415, %v403, %v416
    %vm418 = vcmp.eq.s32.totalorder %v413, 2
    %v419 = vxor.u32 %v403, 2147483648
    %v420 = vsel %vm418, %v419, %v411
    %v421 = vsel %vm414, %v417, %v420
    %v422 = vsel %vm412, nan, %v421
    %v423 = vmul.f32 %v44, %v268
    %v424 = vmul.f32 %v45, %v422
    %v425 = vand.u32 2147483647, %v78
    %vm426 = vcmp.le.f32.partialorder %v425, 0.7853982
    %vm427 = vcmp.lt.s32.totalorder %v78, 0
    %v428 = vand.u32 %v78, 2139095040
    %v429 = vshrl.u32 %v428, 23
    %v430 = vsub.s32 %v429, 127
    %v431 = vand.u32 2147483647, %v78
    %v432 = vand.u32 %v431, 8388607
    %v433 = vor.u32 %v432, 8388608
    %v434 = vsub.s32 0, %v433
    %v435 = vadd.s32 %v430, 1
    %vm436 = vcmp.gt.s32.totalorder %v435, 0
    %v437 = vsel %vm436, %v435, 0
    %v438 = vshrl.u32 %v437, 5
    %v439 = vand.u32 %v437, 31
    %v440 = vsub.s32 32, %v439
    %v441 = vshrl.u32 683565275, %v440
    %v442 = vshll.u32 683565275, %v439
    %v443 = vshrl.u32 2475754826, %v440
    %v444 = vor.u32 %v442, %v443
    %v445 = vshll.u32 2475754826, %v439
    %v446 = vshrl.u32 2131351028, %v440
    %v447 = vor.u32 %v445, %v446
    %v448 = vshll.u32 2131351028, %v439
    %v449 = vshrl.u32 2102212464, %v440
    %v450 = vor.u32 %v448, %v449
    %v451 = vshll.u32 2102212464, %v439
    %v452 = vshrl.u32 920167782, %v440
    %v453 = vor.u32 %v451, %v452
    %v454 = vshll.u32 920167782, %v439
    %v455 = vshrl.u32 1326507024, %v440
    %v456 = vor.u32 %v454, %v455
    %vm457 = vcmp.lt.s32.totalorder %v438, 1
    %vm458 = vcmp.lt.s32.totalorder %v438, 2
    %vm459 = vcmp.lt.s32.totalorder %v438, 3
    %vm460 = vcmp.lt.s32.totalorder %v438, 4
    %v461 = vsel %vm457, %v441, %v444
    %v462 = vsel %vm460, %v450, 2102212464
    %v463 = vsel %vm459, %v447, %v462
    %v464 = vsel %vm458, %v461, %v463
    %v465 = vsel %vm457, %v444, %v447
    %v466 = vsel %vm460, %v453, 920167782
    %v467 = vsel %vm459, %v450, %v466
    %v468 = vsel %vm458, %v465, %v467
    %v469 = vsel %vm457, %v447, %v450
    %v470 = vsel %vm460, %v456, 1326507024
    %v471 = vsel %vm459, %v453, %v470
    %v472 = vsel %vm458, %v469, %v471
    %v473 = vshll.u32 %v433, 8
    %v474 = vand.u32 %v473, 65535
    %v475 = vshrl.u32 %v473, 16
    %v476 = vand.u32 %v472, 65535
    %v477 = vshrl.u32 %v472, 16
    %v478 = vmul.u32 %v474, %v476
    %v479 = vmul.u32 %v474, %v477
    %v480 = vmul.u32 %v475, %v476
    %v481 = vmul.u32 %v475, %v477
    %v482 = vshll.u32 %v479, 16
    %v483 = vshrl.u32 %v479, 16
    %v484 = vshll.u32 %v480, 16
    %v485 = vshrl.u32 %v480, 16
    %vm486 = vc.u32 %v478, %v482
    %v487 = vsel %vm486, 1, 0
    %v488 = vadd.s32 %v478, %v482
    %v489 = vadd.s32 %v481, %v487
    %vm490 = vc.u32 %v488, %v484
    %v491 = vsel %vm490, 1, 0
    %v492 = vadd.s32 %v488, %v484
    %v493 = vadd.s32 %v489, %v491
    %v494 = vadd.s32 %v493, %v483
    %v495 = vadd.s32 %v494, %v485
    %v496 = vand.u32 %v473, 65535
    %v497 = vshrl.u32 %v473, 16
    %v498 = vand.u32 %v468, 65535
    %v499 = vshrl.u32 %v468, 16
    %v500 = vmul.u32 %v496, %v498
    %v501 = vmul.u32 %v496, %v499
    %v502 = vmul.u32 %v497, %v498
    %v503 = vmul.u32 %v497, %v499
    %v504 = vshll.u32 %v501, 16
    %v505 = vshrl.u32 %v501, 16
    %v506 = vshll.u32 %v502, 16
    %v507 = vshrl.u32 %v502, 16
    %vm508 = vc.u32 %v500, %v504
    %v509 = vsel %vm508, 1, 0
    %v510 = vadd.s32 %v500, %v504
    %v511 = vadd.s32 %v503, %v509
    %vm512 = vc.u32 %v510, %v506
    %v513 = vsel %vm512, 1, 0
    %v514 = vadd.s32 %v510, %v506
    %v515 = vadd.s32 %v511, %v513
    %v516 = vadd.s32 %v515, %v505
    %v517 = vadd.s32 %v516, %v507
    %v518 = vmul.u32 %v473, %v464
    %v519 = vadd.s32 %v495, %v514
    %vm520 = vc.u32 %v495, %v514
    %v521 = vadd.s32 %v517, 1
    %v522 = vsel %vm520, %v521, %v517
    %v523 = vadd.s32 %v518, %v522
    %v524 = vadd.s32 %v523, 536870912
    %v525 = vshrl.u32 %v524, 30
    %v526 = vshll.u32 %v525, 30
    %v527 = vsub.s32 %v523, %v526
    %vm528 = vcmp.lt.s32.totalorder %v527, 0
    %v529 = vsub.s32 0, %v527
    %v530 = vsel %vm528, %v529, %v527
    %v531 = vclz %v530
    %v532 = vsub.s32 %v531, 2
    %vm533 = vcmp.gt.s32.totalorder 0, %v532
    %v534 = vsel %vm533, 0, %v532
    %v535 = vsub.s32 32, %v534
    %v536 = vshll.u32 %v527, %v534
    %v537 = vshrl.u32 %v519, %v535
    %v538 = vor.u32 %v536, %v537
    %v539 = vsub.s32 4294967266, %v534
    %v540 = vadd.s32 %v539, 127
    %v541 = vshll.u32 %v540, 23
    %v542 = vor.u32 4788187, %v541
    %v543 = vand.u32 2147483647, %v542
    %v545 = vcvt.s32.f32 %v538
    %v546 = vmul.f32 %v545, %v543
    %v547 = vxor.u32 %v546, 2147483648
    %v548 = vsel %vm427, %v547, %v546
    %v549 = vsub.s32 4, %v525
    %v550 = vsel %vm427, %v549, %v525
    %v551 = vsel %vm426, %v78, %v548
    %v552 = vsel %vm426, 0, %v550
    %v553 = vmul.f32 %v551, %v551
    %v554 = vmul.f32 %v553, -0.001358992
    %v555 = vadd.f32 %v554, 0.041655596
    %v556 = vmul.f32 %v553, %v555
    %v557 = vadd.f32 %v556, -0.4999988
    %v558 = vmul.f32 %v553, %v557
    %v559 = vadd.f32 1.0, %v558
    %v560 = vmul.f32 %v551, %v551
    %v561 = vmul.f32 %v560, -0.00019511016
    %v562 = vadd.f32 %v561, 0.008332121
    %v563 = vmul.f32 %v560, %v562
    %v564 = vadd.f32 %v563, -0.16666654
    %v565 = vmul.f32 %v560, %v564
    %v566 = vadd.f32 %v565, 1.0
    %v567 = vmul.f32 %v566, %v551
    %vm568 = vweird.f32 %v78
    %v569 = vadd.s32 %v552, 3
    %v570 = vand.u32 %v569, 3
    %vm571 = vcmp.lt.s32.totalorder %v570, 2
    %vm572 = vcmp.eq.s32.totalorder %v570, 0
    %v573 = vxor.u32 %v567, 2147483648
    %v574 = vsel %vm572, %v559, %v573
    %vm575 = vcmp.eq.s32.totalorder %v570, 2
    %v576 = vxor.u32 %v559, 2147483648
    %v577 = vsel %vm575, %v576, %v567
    %v578 = vsel %vm571, %v574, %v577
    %v579 = vsel %vm568, nan, %v578
    %v580 = vand.u32 2147483647, %v90
    %vm581 = vcmp.le.f32.partialorder %v580, 0.7853982
    %vm582 = vcmp.lt.s32.totalorder %v90, 0
    %v583 = vand.u32 %v90, 2139095040
    %v584 = vshrl.u32 %v583, 23
    %v585 = vsub.s32 %v584, 127
    %v586 = vand.u32 2147483647, %v90
    %v587 = vand.u32 %v586, 8388607
    %v588 = vor.u32 %v587, 8388608
    %v589 = vsub.s32 0, %v588
    %v590 = vadd.s32 %v585, 1
    %vm591 = vcmp.gt.s32.totalorder %v590, 0
    %v592 = vsel %vm591, %v590, 0
    %v593 = vshrl.u32 %v592, 5
    %v594 = vand.u32 %v592, 31
    %v595 = vsub.s32 32, %v594
    %v596 = vshrl.u32 683565275, %v595
    %v597 = vshll.u32 683565275, %v594
    %v598 = vshrl.u32 2475754826, %v595
    %v599 = vor.u32 %v597, %v598
    %v600 = vshll.u32 2475754826, %v594
    %v601 = vshrl.u32 2131351028, %v595
    %v602 = vor.u32 %v600, %v601
    %v603 = vshll.u32 2131351028, %v594
    %v604 = vshrl.u32 2102212464, %v595
    %v605 = vor.u32 %v603, %v604
    %v606 = vshll.u32 2102212464, %v594
    %v607 = vshrl.u32 920167782, %v595
    %v608 = vor.u32 %v606, %v607
    %v609 = vshll.u32 920167782, %v594
    %v610 = vshrl.u32 1326507024, %v595
    %v611 = vor.u32 %v609, %v610
    %vm612 = vcmp.lt.s32.totalorder %v593, 1
    %vm613 = vcmp.lt.s32.totalorder %v593, 2
    %vm614 = vcmp.lt.s32.totalorder %v593, 3
    %vm615 = vcmp.lt.s32.totalorder %v593, 4
    %v616 = vsel %vm612, %v596, %v599
    %v617 = vsel %vm615, %v605, 2102212464
    %v618 = vsel %vm614, %v602, %v617
    %v619 = vsel %vm613, %v616, %v618
    %v620 = vsel %vm612, %v599, %v602
    %v621 = vsel %vm615, %v608, 920167782
    %v622 = vsel %vm614, %v605, %v621
    %v623 = vsel %vm613, %v620, %v622
    %v624 = vsel %vm612, %v602, %v605
    %v625 = vsel %vm615, %v611, 1326507024
    %v626 = vsel %vm614, %v608, %v625
    %v627 = vsel %vm613, %v624, %v626
    %v628 = vshll.u32 %v588, 8
    %v629 = vand.u32 %v628, 65535
    %v630 = vshrl.u32 %v628, 16
    %v631 = vand.u32 %v627, 65535
    %v632 = vshrl.u32 %v627, 16
    %v633 = vmul.u32 %v629, %v631
    %v634 = vmul.u32 %v629, %v632
    %v635 = vmul.u32 %v630, %v631
    %v636 = vmul.u32 %v630, %v632
    %v637 = vshll.u32 %v634, 16
    %v638 = vshrl.u32 %v634, 16
    %v639 = vshll.u32 %v635, 16
    %v640 = vshrl.u32 %v635, 16
    %vm641 = vc.u32 %v633, %v637
    %v642 = vsel %vm641, 1, 0
    %v643 = vadd.s32 %v633, %v637
    %v644 = vadd.s32 %v636, %v642
    %vm645 = vc.u32 %v643, %v639
    %v646 = vsel %vm645, 1, 0
    %v647 = vadd.s32 %v643, %v639
    %v648 = vadd.s32 %v644, %v646
    %v649 = vadd.s32 %v648, %v638
    %v650 = vadd.s32 %v649, %v640
    %v651 = vand.u32 %v628, 65535
    %v652 = vshrl.u32 %v628, 16
    %v653 = vand.u32 %v623, 65535
    %v654 = vshrl.u32 %v623, 16
    %v655 = vmul.u32 %v651, %v653
    %v656 = vmul.u32 %v651, %v654
    %v657 = vmul.u32 %v652, %v653
    %v658 = vmul.u32 %v652, %v654
    %v659 = vshll.u32 %v656, 16
    %v660 = vshrl.u32 %v656, 16
    %v661 = vshll.u32 %v657, 16
    %v662 = vshrl.u32 %v657, 16
    %vm663 = vc.u32 %v655, %v659
    %v664 = vsel %vm663, 1, 0
    %v665 = vadd.s32 %v655, %v659
    %v666 = vadd.s32 %v658, %v664
    %vm667 = vc.u32 %v665, %v661
    %v668 = vsel %vm667, 1, 0
    %v669 = vadd.s32 %v665, %v661
    %v670 = vadd.s32 %v666, %v668
    %v671 = vadd.s32 %v670, %v660
    %v672 = vadd.s32 %v671, %v662
    %v673 = vmul.u32 %v628, %v619
    %v674 = vadd.s32 %v650, %v669
    %vm675 = vc.u32 %v650, %v669
    %v676 = vadd.s32 %v672, 1
    %v677 = vsel %vm675, %v676, %v672
    %v678 = vadd.s32 %v673, %v677
    %v679 = vadd.s32 %v678, 536870912
    %v680 = vshrl.u32 %v679, 30
    %v681 = vshll.u32 %v680, 30
    %v682 = vsub.s32 %v678, %v681
    %vm683 = vcmp.lt.s32.totalorder %v682, 0
    %v684 = vsub.s32 0, %v682
    %v685 = vsel %vm683, %v684, %v682
    %v686 = vclz %v685
    %v687 = vsub.s32 %v686, 2
    %vm688 = vcmp.gt.s32.totalorder 0, %v687
    %v689 = vsel %vm688, 0, %v687
    %v690 = vsub.s32 32, %v689
    %v691 = vshll.u32 %v682, %v689
    %v692 = vshrl.u32 %v674, %v690
    %v693 = vor.u32 %v691, %v692
    %v694 = vsub.s32 4294967266, %v689
    %v695 = vadd.s32 %v694, 127
    %v696 = vshll.u32 %v695, 23
    %v697 = vor.u32 4788187, %v696
    %v698 = vand.u32 2147483647, %v697
    %v700 = vcvt.s32.f32 %v693
    %v701 = vmul.f32 %v700, %v698
    %v702 = vxor.u32 %v701, 2147483648
    %v703 = vsel %vm582, %v702, %v701
    %v704 = vsub.s32 4, %v680
    %v705 = vsel %vm582, %v704, %v680
    %v706 = vsel %vm581, %v90, %v703
    %v707 = vsel %vm581, 0, %v705
    %v708 = vmul.f32 %v706, %v706
    %v709 = vmul.f32 %v708, -0.001358992
    %v710 = vadd.f32 %v709, 0.041655596
    %v711 = vmul.f32 %v708, %v710
    %v712 = vadd.f32 %v711, -0.4999988
    %v713 = vmul.f32 %v708, %v712
    %v714 = vadd.f32 1.0, %v713
    %v715 = vmul.f32 %v706, %v706
    %v716 = vmul.f32 %v715, -0.00019511016
    %v717 = vadd.f32 %v716, 0.008332121
    %v718 = vmul.f32 %v715, %v717
    %v719 = vadd.f32 %v718, -0.16666654
    %v720 = vmul.f32 %v715, %v719
    %v721 = vadd.f32 %v720, 1.0
    %v722 = vmul.f32 %v721, %v706
    %vm723 = vweird.f32 %v90
    %v724 = vadd.s32 %v707, 3
    %v725 = vand.u32 %v724, 3
    %vm726 = vcmp.lt.s32.totalorder %v725, 2
    %vm727 = vcmp.eq.s32.totalorder %v725, 0
    %v728 = vxor.u32 %v722, 2147483648
    %v729 = vsel %vm727, %v714, %v728
    %vm730 = vcmp.eq.s32.totalorder %v725, 2
    %v731 = vxor.u32 %v714, 2147483648
    %v732 = vsel %vm730, %v731, %v722
    %v733 = vsel %vm726, %v729, %v732
    %v734 = vsel %vm723, nan, %v733
    %v735 = vmul.f32 %v579, %v104
    %v736 = vmul.f32 %v734, %v114
    %v737 = vmul.f32 %v46, %v735
    %v738 = vmul.f32 %v47, %v736
    %v739 = vadd.f32 %v423, %v737
    %v740 = vadd.f32 %v424, %v738
    %v741 = vmax.f32 %v63, 1e-30
    %v742 = vmax.f32 %v66, 1e-30
    %v743 = vrsqrt.pop %v741
    %v744 = vmul.f32 %v743, %v741
    %v745 = vmul.f32 %v744, %v743
    %v746 = vmul.f32 0.5, %v745
    %v747 = vsub.f32 1.5, %v746
    %v748 = vmul.f32 %v743, %v747
    %vm749 = vweird.f32 %v741
    %vm750 = vweird.f32 %v743
    %vm751 = vmor %vm749, %vm750
    %v752 = vsel %vm751, %v743, %v748
    %v753 = vrsqrt.pop %v742
    %v754 = vmul.f32 %v753, %v742
    %v755 = vmul.f32 %v754, %v753
    %v756 = vmul.f32 0.5, %v755
    %v757 = vsub.f32 1.5, %v756
    %v758 = vmul.f32 %v753, %v757
    %vm759 = vweird.f32 %v742
    %vm760 = vweird.f32 %v753
    %vm761 = vmor %vm759, %vm760
    %v762 = vsel %vm761, %v753, %v758
    %v763 = vmul.f32 %v57, %v752
    %v764 = vmul.f32 %v58, %v762
    %v765 = vsel %vm91, 1, 0
    %v766 = vsel %vm92, 1, 0
    %vm767 = vcmp.eq.s32.totalorder %v765, 1
    %vm768 = vcmp.eq.s32.totalorder %v766, 1
    %v769 = vsel %vm767, %v739, %v763
    %v770 = vsel %vm768, %v740, %v764
    %771 = vst.msk [vmem:[#allocation7] sm:$0xff] %vm50, %v769
    %772 = vst.msk [vmem:[#allocation7 + $0x8] sm:$0xff] %vm50, %v770
    // Predicated region
    $region18: #{tpu_custom_call.1} parent=1 // pred_check
      _
    $region19: #{tpu_custom_call.1} parent=1 // pred_check_branch
      %774 = sbr.rel (0) target = $region21
    $region20: #{tpu_custom_call.1} parent=1 // pred_region
      %776 = vsyncadd [#allocation4], 0
      %s777 = sshll.u32 [#allocation7], 4
      %s778 = int_to_ptr.vmem [resolvable:$true] %s777
      %s779 = sshll.u32 %s2, 4
      %s780 = int_to_ptr.hbm [resolvable:$true] %s779
      %785 = dma.vmem_to_hbm [thread:$0]  %s778, 256, %s780, [#allocation4], 128, 128, 8
    $region21: #{tpu_custom_call.1} parent=1 // pred_fallthru
      _
    // Predicated region
    $region22: #{tpu_custom_call.1} parent=1 // pred_check
      _
    $region23: #{tpu_custom_call.1} parent=1 // pred_check_branch
      %787 = sbr.rel (0) target = $region25
    $region24: #{tpu_custom_call.1} parent=1 // pred_region
      %789 = dma.done [#allocation4], 256
    $region25: #{tpu_custom_call.1} parent=1 // pred_fallthru
      _
    %790 = vsyncpa [#allocation3], 1
    %791 = vsyncpa [#allocation6], 1
    %792 = vsyncpa [#allocation4], 1

</llo_original>
